<compile_context>
chip_gen: v7x
topology: tpu7x:2x2x1
jax: 0.10.0
libtpu: 0.0.40
codegen_flags: <defaults>
</compile_context>

<pallas_src>
from functools import partial

import jax
import jax.numpy as jnp
from jax.experimental import pallas as pl
from jax.experimental.pallas import tpu as pltpu

NEGATIVE_SLOPE = 1.0 / 100.0
HIDDEN = (400, 300)
MAX_W = 500.0
MIN_W = 1e-8            # min_w == min_w_no_clipping in the PyTorch module


def _round_up(n, m):
    return ((n + m - 1) // m) * m


def _softplus(x):
    # Numerically stable softplus; identical formulation in kernel and reference.
    return jnp.maximum(x, 0.0) + jnp.log(1.0 + jnp.exp(-jnp.abs(x)))


def _density_ratio_kernel(x_ref, w1_ref, b1_ref, w2_ref, b2_ref, w3_ref, b3_ref,
                          out_ref, *, output_clipping, alpha):
    """3-layer MLP (leaky_relu x2, linear) + softplus output transform."""
    x = x_ref[...]                                              # bf16 (tile_b, in_p)

    h = jnp.dot(x, w1_ref[...], preferred_element_type=jnp.float32) + b1_ref[...]
    h = jnp.where(h >= 0.0, h, NEGATIVE_SLOPE * h)              # f32 leaky_relu(0.01)

    h = jnp.dot(h.astype(jnp.bfloat16), w2_ref[...],
                preferred_element_type=jnp.float32) + b2_ref[...]
    h = jnp.where(h >= 0.0, h, NEGATIVE_SLOPE * h)

    q = jnp.dot(h.astype(jnp.bfloat16), w3_ref[...],
                preferred_element_type=jnp.float32) + b3_ref[...]

    if output_clipping:
        q = MAX_W - _softplus(MAX_W - q)
        q = MIN_W + _softplus(q - MIN_W)
    else:
        q = _softplus(q - MIN_W) + MIN_W
        q = jnp.exp(alpha * jnp.log(q))                         # q > 0, so pow is safe

    out_ref[...] = q                                            # lane-dense (tile_b, 128)


def density_ratio_forward(state_action, params, *, output_clipping, alpha,
                          tile_b=512):
    """Run the Pallas DensityRatio MLP. state_action: (B, state+action) f32."""
    w1, b1, w2, b2, w3, b3 = params
    B, in_dim = state_action.shape
    in_p = w1.shape[0]
    out_p = w3.shape[1]

    # Batch tile: multiple of 8 sublanes, capped so weights (~0.6 MB bf16) plus
    # double-buffered x/out tiles and activations fit far below the scoped
    # VMEM limit on every generation (incl. v7x's 64 MiB VMEM).
    tile_b = min(tile_b, _round_up(B, 8))
    b_pad = _round_up(B, tile_b)

    x = jnp.zeros((b_pad, in_p), jnp.bfloat16)
    x = x.at[:B, :in_dim].set(state_action.astype(jnp.bfloat16))

    kernel = partial(_density_ratio_kernel,
                     output_clipping=bool(output_clipping), alpha=float(alpha))

    grid = (b_pad // tile_b,)
    flops = 2 * b_pad * (w1.shape[0] * w1.shape[1]
                         + w2.shape[0] * w2.shape[1]
                         + w3.shape[0] * w3.shape[1])
    bytes_accessed = int(x.size) * 2 + b_pad * out_p * 4
    bytes_accessed += sum(int(p.size) * p.dtype.itemsize for p in params)

    out = pl.pallas_call(
        kernel,
        out_shape=jax.ShapeDtypeStruct((b_pad, out_p), jnp.float32),
        grid_spec=pltpu.PrefetchScalarGridSpec(
            num_scalar_prefetch=0,
            grid=grid,
            in_specs=[
                pl.BlockSpec((tile_b, in_p), lambda i: (i, 0)),
                # Weights/biases: constant index_map -> stay VMEM-resident.
                pl.BlockSpec(w1.shape, lambda i: (0, 0)),
                pl.BlockSpec(b1.shape, lambda i: (0, 0)),
                pl.BlockSpec(w2.shape, lambda i: (0, 0)),
                pl.BlockSpec(b2.shape, lambda i: (0, 0)),
                pl.BlockSpec(w3.shape, lambda i: (0, 0)),
                pl.BlockSpec(b3.shape, lambda i: (0, 0)),
            ],
            out_specs=pl.BlockSpec((tile_b, out_p), lambda i: (i, 0)),
        ),
        compiler_params=pltpu.CompilerParams(
            dimension_semantics=("parallel",)),       # uses v7x's 2nd TensorCore
        cost_estimate=pl.CostEstimate(
            flops=flops,
            transcendentals=4 * b_pad * out_p,
            bytes_accessed=bytes_accessed),
    )(x, w1, b1, w2, b2, w3, b3)

    return out[:B, :1]


class DensityRatioPallas:
    """JAX/Pallas equivalent of the PyTorch DensityRatio module."""

    def __init__(self, state_dim, action_dim, output_clipping,
                 smoothing_power_alpha, key):
        self.hidden_size = HIDDEN
        self.state_dim = int(state_dim)
        self.action_dim = int(action_dim)
        if isinstance(output_clipping, str):
            self.output_clipping = output_clipping == "True"
        else:
            self.output_clipping = bool(output_clipping)
        self.smoothing_power_alpha = float(smoothing_power_alpha)

        in_dim = self.state_dim + self.action_dim
        in_p = _round_up(in_dim, 128)
        h1_p = _round_up(HIDDEN[0], 128)       # 400 -> 512
        h2_p = _round_up(HIDDEN[1], 128)       # 300 -> 384
        out_p = 128                            # 1 -> 128 (lane-dense output)
        self._in_dim = in_dim

        def default_linear(k, fan_in, fan_out):
            # nn.Linear default: U(-1/sqrt(fan_in), 1/sqrt(fan_in)).
            kw, kb = jax.random.split(k)
            bound = 1.0 / (fan_in ** 0.5)
            w = jax.random.uniform(kw, (fan_in, fan_out), jnp.float32, -bound, bound)
            b = jax.random.uniform(kb, (1, fan_out), jnp.float32, -bound, bound)
            return w, b

        def pad_linear(w, b, rows_p, cols_p):
            # Zero-padded so the extra rows/cols contribute exactly 0.
            w_p = jnp.zeros((rows_p, cols_p), jnp.float32)
            w_p = w_p.at[: w.shape[0], : w.shape[1]].set(w)
            b_p = jnp.zeros((1, cols_p), jnp.float32)
            b_p = b_p.at[:, : b.shape[1]].set(b)
            # Weights in bf16 (MXU native, half the DMA); biases stay f32.
            return w_p.astype(jnp.bfloat16), b_p

        k1, k2, k3 = jax.random.split(key, 3)
        w1, b1 = default_linear(k1, in_dim, HIDDEN[0])
        w2, b2 = default_linear(k2, HIDDEN[0], HIDDEN[1])
        # l3: weight U(-0.003, 0.003), bias = 0 (as in the PyTorch module).
        w3 = jax.random.uniform(k3, (HIDDEN[1], 1), jnp.float32, -0.003, 0.003)
        b3 = jnp.zeros((1, 1), jnp.float32)

        w1p, b1p = pad_linear(w1, b1, in_p, h1_p)
        w2p, b2p = pad_linear(w2, b2, h1_p, h2_p)
        w3p, b3p = pad_linear(w3, b3, h2_p, out_p)
        self.params = (w1p, b1p, w2p, b2p, w3p, b3p)

    def forward(self, state, action):
        state = jnp.asarray(state, jnp.float32)
        action = jnp.asarray(action, jnp.float32)
        state_action = jnp.concatenate([state, action], axis=-1)
        return density_ratio_forward(
            state_action, self.params,
            output_clipping=self.output_clipping,
            alpha=self.smoothing_power_alpha)


def _reference_forward(state_action, params, output_clipping, alpha):
    """Pure-JAX reference replicating the kernel's bf16/f32 numerics."""
    w1, b1, w2, b2, w3, b3 = params
    f32 = jnp.float32
    x = state_action.astype(jnp.bfloat16).astype(f32)
    x = jnp.pad(x, ((0, 0), (0, w1.shape[0] - x.shape[1])))
    h = x @ w1.astype(f32) + b1
    h = jnp.where(h >= 0.0, h, NEGATIVE_SLOPE * h)
    h = h.astype(jnp.bfloat16).astype(f32) @ w2.astype(f32) + b2
    h = jnp.where(h >= 0.0, h, NEGATIVE_SLOPE * h)
    q = h.astype(jnp.bfloat16).astype(f32) @ w3.astype(f32) + b3
    if output_clipping:
        q = MAX_W - _softplus(MAX_W - q)
        q = MIN_W + _softplus(q - MIN_W)
    else:
        q = _softplus(q - MIN_W) + MIN_W
        q = jnp.exp(alpha * jnp.log(q))
    return q[:, :1]


if __name__ == "__main__":
    key = jax.random.PRNGKey(0)
    kparams, kstate, kaction = jax.random.split(key, 3)

    batch, state_dim, action_dim = 8, 16, 4

    state = jax.random.normal(kstate, (batch, state_dim), jnp.float32)
    action = jax.random.normal(kaction, (batch, action_dim), jnp.float32)

    outputs = []
    for clip_flag in ("True", "False"):
        net = DensityRatioPallas(state_dim, action_dim,
                                 output_clipping=clip_flag,
                                 smoothing_power_alpha=0.5, key=kparams)
        out = net.forward(state, action)
        jax.block_until_ready(out)
        outputs.append(out)

        assert out.shape == (batch, 1)
        assert bool(jnp.all(jnp.isfinite(out)))

        sa = jnp.concatenate([state, action], axis=-1)
        ref = _reference_forward(sa, net.params, net.output_clipping,
                                 net.smoothing_power_alpha)
        assert jnp.allclose(out, ref, atol=1e-3, rtol=1e-3), (out, ref)

    jax.block_until_ready(outputs)
    print("KERNEL_OK")
</pallas_src>

<mosaic_0001>
module attributes {stable_mosaic.version = 11 : i64} {
  func.func @_density_ratio_kernel(%arg0: i32, %arg1: memref<8x128xbf16, #tpu.memory_space<vmem>>, %arg2: memref<128x512xbf16, #tpu.memory_space<vmem>>, %arg3: memref<1x512xf32, #tpu.memory_space<vmem>>, %arg4: memref<512x384xbf16, #tpu.memory_space<vmem>>, %arg5: memref<1x384xf32, #tpu.memory_space<vmem>>, %arg6: memref<384x128xbf16, #tpu.memory_space<vmem>>, %arg7: memref<1x128xf32, #tpu.memory_space<vmem>>, %arg8: memref<8x128xf32, #tpu.memory_space<vmem>>) attributes {dimension_semantics = [#tpu.dimension_semantics<parallel>], iteration_bounds = array<i64: 1>, scalar_prefetch = 0 : i64, scratch_operands = 0 : i64, tpu.core_type = #tpu.core_type<tc>, window_params = [{transform_indices = @transform_0, window_bounds = array<i64: 8, 128>}, {pipeline_mode = #tpu.pipeline_mode<synchronous>, transform_indices = @transform_1, window_bounds = array<i64: 128, 512>}, {pipeline_mode = #tpu.pipeline_mode<synchronous>, transform_indices = @transform_2, window_bounds = array<i64: 1, 512>}, {pipeline_mode = #tpu.pipeline_mode<synchronous>, transform_indices = @transform_3, window_bounds = array<i64: 512, 384>}, {pipeline_mode = #tpu.pipeline_mode<synchronous>, transform_indices = @transform_4, window_bounds = array<i64: 1, 384>}, {pipeline_mode = #tpu.pipeline_mode<synchronous>, transform_indices = @transform_5, window_bounds = array<i64: 384, 128>}, {pipeline_mode = #tpu.pipeline_mode<synchronous>, transform_indices = @transform_6, window_bounds = array<i64: 1, 128>}, {transform_indices = @transform_7, window_bounds = array<i64: 8, 128>}]} {
    %c0 = arith.constant 0 : index
    %c0_0 = arith.constant 0 : index
    %0 = vector.load %arg1[%c0, %c0_0] : memref<8x128xbf16, #tpu.memory_space<vmem>>, vector<8x128xbf16>
    %c0_1 = arith.constant 0 : index
    %c0_2 = arith.constant 0 : index
    %1 = vector.load %arg2[%c0_1, %c0_2] : memref<128x512xbf16, #tpu.memory_space<vmem>>, vector<128x512xbf16>
    %cst = arith.constant dense<0.000000e+00> : vector<8x512xf32>
    %2 = tpu.matmul %0, %1, %cst {dimension_numbers = #tpu.dot_dimension_numbers<[1], [0], [0], [1], [0, 0, 1, 1], [], []>} : vector<8x128xbf16>, vector<128x512xbf16>, vector<8x512xf32> -> vector<8x512xf32>
    %c0_3 = arith.constant 0 : index
    %c0_4 = arith.constant 0 : index
    %3 = vector.load %arg3[%c0_3, %c0_4] : memref<1x512xf32, #tpu.memory_space<vmem>>, vector<1x512xf32>
    %4 = vector.broadcast %3 : vector<1x512xf32> to vector<8x512xf32>
    %5 = arith.addf %2, %4 : vector<8x512xf32>
    %cst_5 = arith.constant 0.000000e+00 : f32
    %6 = vector.broadcast %cst_5 : f32 to vector<8x512xf32>
    %7 = arith.cmpf oge, %5, %6 : vector<8x512xf32>
    %cst_6 = arith.constant 0.00999999977 : f32
    %8 = vector.broadcast %cst_6 : f32 to vector<8x512xf32>
    %9 = arith.mulf %8, %5 : vector<8x512xf32>
    %10 = arith.select %7, %5, %9 : vector<8x512xi1>, vector<8x512xf32>
    %11 = arith.truncf %10 : vector<8x512xf32> to vector<8x512xbf16>
    %c0_7 = arith.constant 0 : index
    %c0_8 = arith.constant 0 : index
    %12 = vector.load %arg4[%c0_7, %c0_8] : memref<512x384xbf16, #tpu.memory_space<vmem>>, vector<512x384xbf16>
    %cst_9 = arith.constant dense<0.000000e+00> : vector<8x384xf32>
    %13 = tpu.matmul %11, %12, %cst_9 {dimension_numbers = #tpu.dot_dimension_numbers<[1], [0], [0], [1], [0, 0, 1, 1], [], []>} : vector<8x512xbf16>, vector<512x384xbf16>, vector<8x384xf32> -> vector<8x384xf32>
    %c0_10 = arith.constant 0 : index
    %c0_11 = arith.constant 0 : index
    %14 = vector.load %arg5[%c0_10, %c0_11] : memref<1x384xf32, #tpu.memory_space<vmem>>, vector<1x384xf32>
    %15 = vector.broadcast %14 : vector<1x384xf32> to vector<8x384xf32>
    %16 = arith.addf %13, %15 : vector<8x384xf32>
    %cst_12 = arith.constant 0.000000e+00 : f32
    %17 = vector.broadcast %cst_12 : f32 to vector<8x384xf32>
    %18 = arith.cmpf oge, %16, %17 : vector<8x384xf32>
    %cst_13 = arith.constant 0.00999999977 : f32
    %19 = vector.broadcast %cst_13 : f32 to vector<8x384xf32>
    %20 = arith.mulf %19, %16 : vector<8x384xf32>
    %21 = arith.select %18, %16, %20 : vector<8x384xi1>, vector<8x384xf32>
    %22 = arith.truncf %21 : vector<8x384xf32> to vector<8x384xbf16>
    %c0_14 = arith.constant 0 : index
    %c0_15 = arith.constant 0 : index
    %23 = vector.load %arg6[%c0_14, %c0_15] : memref<384x128xbf16, #tpu.memory_space<vmem>>, vector<384x128xbf16>
    %cst_16 = arith.constant dense<0.000000e+00> : vector<8x128xf32>
    %24 = tpu.matmul %22, %23, %cst_16 {dimension_numbers = #tpu.dot_dimension_numbers<[1], [0], [0], [1], [0, 0, 1, 1], [], []>} : vector<8x384xbf16>, vector<384x128xbf16>, vector<8x128xf32> -> vector<8x128xf32>
    %c0_17 = arith.constant 0 : index
    %c0_18 = arith.constant 0 : index
    %25 = vector.load %arg7[%c0_17, %c0_18] : memref<1x128xf32, #tpu.memory_space<vmem>>, vector<1x128xf32>
    %26 = vector.broadcast %25 : vector<1x128xf32> to vector<8x128xf32>
    %27 = arith.addf %24, %26 : vector<8x128xf32>
    %cst_19 = arith.constant 5.000000e+02 : f32
    %28 = vector.broadcast %cst_19 : f32 to vector<8x128xf32>
    %29 = arith.subf %28, %27 : vector<8x128xf32>
    %cst_20 = arith.constant 0.000000e+00 : f32
    %30 = vector.broadcast %cst_20 : f32 to vector<8x128xf32>
    %31 = arith.maximumf %29, %30 : vector<8x128xf32>
    %32 = math.absf %29 : vector<8x128xf32>
    %cst_21 = arith.constant 0.000000e+00 : f32
    %33 = vector.broadcast %cst_21 : f32 to vector<8x128xf32>
    %34 = arith.subf %33, %32 : vector<8x128xf32>
    %35 = math.exp %34 : vector<8x128xf32>
    %cst_22 = arith.constant 1.000000e+00 : f32
    %36 = vector.broadcast %cst_22 : f32 to vector<8x128xf32>
    %37 = arith.addf %36, %35 : vector<8x128xf32>
    %38 = math.log %37 : vector<8x128xf32>
    %39 = arith.addf %31, %38 : vector<8x128xf32>
    %cst_23 = arith.constant 5.000000e+02 : f32
    %40 = vector.broadcast %cst_23 : f32 to vector<8x128xf32>
    %41 = arith.subf %40, %39 : vector<8x128xf32>
    %cst_24 = arith.constant 9.99999993E-9 : f32
    %42 = vector.broadcast %cst_24 : f32 to vector<8x128xf32>
    %43 = arith.subf %41, %42 : vector<8x128xf32>
    %cst_25 = arith.constant 0.000000e+00 : f32
    %44 = vector.broadcast %cst_25 : f32 to vector<8x128xf32>
    %45 = arith.maximumf %43, %44 : vector<8x128xf32>
    %46 = math.absf %43 : vector<8x128xf32>
    %cst_26 = arith.constant 0.000000e+00 : f32
    %47 = vector.broadcast %cst_26 : f32 to vector<8x128xf32>
    %48 = arith.subf %47, %46 : vector<8x128xf32>
    %49 = math.exp %48 : vector<8x128xf32>
    %cst_27 = arith.constant 1.000000e+00 : f32
    %50 = vector.broadcast %cst_27 : f32 to vector<8x128xf32>
    %51 = arith.addf %50, %49 : vector<8x128xf32>
    %52 = math.log %51 : vector<8x128xf32>
    %53 = arith.addf %45, %52 : vector<8x128xf32>
    %cst_28 = arith.constant 9.99999993E-9 : f32
    %54 = vector.broadcast %cst_28 : f32 to vector<8x128xf32>
    %55 = arith.addf %54, %53 : vector<8x128xf32>
    %c0_29 = arith.constant 0 : index
    %c0_30 = arith.constant 0 : index
    %56 = vector.load %arg8[%c0_29, %c0_30] : memref<8x128xf32, #tpu.memory_space<vmem>>, vector<8x128xf32>
    tpu.vector_store %arg8[%c0_29, %c0_30], %55 {strides = array<i32>} : memref<8x128xf32, #tpu.memory_space<vmem>>, vector<8x128xf32>,
    return
  }
  func.func @transform_0(%arg0: i32) -> (i32, i32) {
    %c0_i32 = arith.constant 0 : i32
    %c0_i32_0 = arith.constant 0 : i32
    return %arg0, %c0_i32 : i32, i32
  }
  func.func @transform_1(%arg0: i32) -> (i32, i32) {
    %c0_i32 = arith.constant 0 : i32
    %c0_i32_0 = arith.constant 0 : i32
    %c0_i32_1 = arith.constant 0 : i32
    return %c0_i32, %c0_i32_0 : i32, i32
  }
  func.func @transform_2(%arg0: i32) -> (i32, i32) {
    %c0_i32 = arith.constant 0 : i32
    %c0_i32_0 = arith.constant 0 : i32
    %c0_i32_1 = arith.constant 0 : i32
    return %c0_i32, %c0_i32_0 : i32, i32
  }
  func.func @transform_3(%arg0: i32) -> (i32, i32) {
    %c0_i32 = arith.constant 0 : i32
    %c0_i32_0 = arith.constant 0 : i32
    %c0_i32_1 = arith.constant 0 : i32
    return %c0_i32, %c0_i32_0 : i32, i32
  }
  func.func @transform_4(%arg0: i32) -> (i32, i32) {
    %c0_i32 = arith.constant 0 : i32
    %c0_i32_0 = arith.constant 0 : i32
    %c0_i32_1 = arith.constant 0 : i32
    return %c0_i32, %c0_i32_0 : i32, i32
  }
  func.func @transform_5(%arg0: i32) -> (i32, i32) {
    %c0_i32 = arith.constant 0 : i32
    %c0_i32_0 = arith.constant 0 : i32
    %c0_i32_1 = arith.constant 0 : i32
    return %c0_i32, %c0_i32_0 : i32, i32
  }
  func.func @transform_6(%arg0: i32) -> (i32, i32) {
    %c0_i32 = arith.constant 0 : i32
    %c0_i32_0 = arith.constant 0 : i32
    %c0_i32_1 = arith.constant 0 : i32
    return %c0_i32, %c0_i32_0 : i32, i32
  }
  func.func @transform_7(%arg0: i32) -> (i32, i32) {
    %c0_i32 = arith.constant 0 : i32
    %c0_i32_0 = arith.constant 0 : i32
    return %arg0, %c0_i32 : i32, i32
  }
}

</mosaic_0001>

<llo_original>
// kernel: tpu_custom_call.1
$region0: #{tpu_custom_call.1}
  #allocation0 [shape = 'u32[]', space=smem, size = 0x4, offset = 0x4, fixed_abs, tag = 'smem constant byte address 0x4 - core index']
  #allocation1 [shape = 'u32[144,128]{1,0:T(1,128)}', space=vmem, size = 0x12000, scoped, tag = 'internal scratch']
  %s0 = inlined_call_operand.hbm [shape: bf16[8,128], index: 0, kind: input, shape index: {}]
  %s1 = inlined_call_operand.hbm [shape: bf16[128,512], index: 1, kind: input, shape index: {}]
  %s2 = inlined_call_operand.vmem [shape: f32[1,512], index: 2, kind: input, shape index: {}]
  %s3 = inlined_call_operand.hbm [shape: bf16[512,384], index: 3, kind: input, shape index: {}]
  %s4 = inlined_call_operand.vmem [shape: f32[1,384], index: 4, kind: input, shape index: {}]
  %s5 = inlined_call_operand.hbm [shape: bf16[384,128], index: 5, kind: input, shape index: {}]
  %s6 = inlined_call_operand.vmem [shape: f32[1,128], index: 6, kind: input, shape index: {}]
  %s7 = inlined_call_operand.hbm [shape: f32[8,128], index: 7, kind: output, shape index: {}]
  %s8 = sld [smem:[#allocation0]]
  $region54: #{tpu_custom_call.1} parent=0
    _
  %s10 = ssub.s32 1, %s8
  %s11 = scalar_select 0, %s10, %s8
  $region1: #{tpu_custom_call.1} parent=0
    #allocation2 [shape = 'u8[2048]{0}', space=vmem, size = 0x800, scoped, tag = 'input window, operand 0, single buffered']
    #allocation3 [shape = 's32[1]{0}', space=sflag, size = 0x4, scoped, tag = 'scoped memory for tpu_custom_call.1']
    #allocation4 [shape = 's32[1]{0}', space=sflag, size = 0x4, scoped, tag = 'scoped memory for tpu_custom_call.1']
    #allocation5 [shape = 'u8[131072]{0}', space=vmem, size = 0x20000, scoped, tag = 'input window, operand 1, single buffered']
    #allocation6 [shape = 's32[1]{0}', space=sflag, size = 0x4, scoped, tag = 'scoped memory for tpu_custom_call.1']
    #allocation7 [shape = 'u8[393216]{0}', space=vmem, size = 0x60000, scoped, tag = 'input window, operand 3, single buffered']
    #allocation8 [shape = 'u8[98304]{0}', space=vmem, size = 0x18000, scoped, tag = 'input window, operand 5, single buffered']
    #allocation9 [shape = 's32[1]{0}', space=sflag, size = 0x4, scoped, tag = 'scoped memory for tpu_custom_call.1']
    #allocation10 [shape = 'u8[4096]{0}', space=vmem, size = 0x1000, scoped, tag = 'output window, operand 0, single buffered']
    %12 = vsyncpa [#allocation3], 0
    %13 = vsyncpa [#allocation6], 0
    %14 = vsyncpa [#allocation9], 0
    %15 = vsyncpa [#allocation4], 0
    // Predicated region
    $region2: #{tpu_custom_call.1} parent=1 // pred_check
      _
    $region3: #{tpu_custom_call.1} parent=1 // pred_check_branch
      %17 = sbr.rel (0) target = $region5
    $region4: #{tpu_custom_call.1} parent=1 // pred_region
      %s19 = ssub.s32 64, 64
      %20 = vsyncadd [#allocation3], %s19
      %s22 = sshll.u32 [#allocation2], 4
      %s23 = int_to_ptr.vmem [resolvable:$true] %s22
      %25 = dma.hbm_to_vmem [thread:$0]  %s0, 64, %s23, [#allocation3]
    $region5: #{tpu_custom_call.1} parent=1 // pred_fallthru
      _
    // Predicated region
    $region6: #{tpu_custom_call.1} parent=1 // pred_check
      _
    $region7: #{tpu_custom_call.1} parent=1 // pred_check_branch
      %27 = sbr.rel (0) target = $region9
    $region8: #{tpu_custom_call.1} parent=1 // pred_region
      %s29 = ssub.s32 4096, 4096
      %30 = vsyncadd [#allocation6], %s29
      %s31 = sshll.u32 [#allocation5], 4
      %s32 = int_to_ptr.vmem [resolvable:$true] %s31
      %37 = dma.hbm_to_vmem [thread:$0]  %s1, 4096, %s32, [#allocation6], 256, 256, 16
    $region9: #{tpu_custom_call.1} parent=1 // pred_fallthru
      _
    // Predicated region
    $region10: #{tpu_custom_call.1} parent=1 // pred_check
      _
    $region11: #{tpu_custom_call.1} parent=1 // pred_check_branch
      %39 = sbr.rel (0) target = $region13
    $region12: #{tpu_custom_call.1} parent=1 // pred_region
      _
    $region13: #{tpu_custom_call.1} parent=1 // pred_fallthru
      _
    // Predicated region
    $region14: #{tpu_custom_call.1} parent=1 // pred_check
      _
    $region15: #{tpu_custom_call.1} parent=1 // pred_check_branch
      %41 = sbr.rel (0) target = $region17
    $region16: #{tpu_custom_call.1} parent=1 // pred_region
      %s43 = ssub.s32 12288, 12288
      %44 = vsyncadd [#allocation6], %s43
      %s45 = sshll.u32 [#allocation7], 4
      %s46 = int_to_ptr.vmem [resolvable:$true] %s45
      %51 = dma.hbm_to_vmem [thread:$0]  %s3, 12288, %s46, [#allocation6], 192, 192, 12
    $region17: #{tpu_custom_call.1} parent=1 // pred_fallthru
      _
    // Predicated region
    $region18: #{tpu_custom_call.1} parent=1 // pred_check
      _
    $region19: #{tpu_custom_call.1} parent=1 // pred_check_branch
      %53 = sbr.rel (0) target = $region21
    $region20: #{tpu_custom_call.1} parent=1 // pred_region
      _
    $region21: #{tpu_custom_call.1} parent=1 // pred_fallthru
      _
    // Predicated region
    $region22: #{tpu_custom_call.1} parent=1 // pred_check
      _
    $region23: #{tpu_custom_call.1} parent=1 // pred_check_branch
      %55 = sbr.rel (0) target = $region25
    $region24: #{tpu_custom_call.1} parent=1 // pred_region
      %s57 = ssub.s32 3072, 3072
      %58 = vsyncadd [#allocation9], %s57
      %s59 = sshll.u32 [#allocation8], 4
      %s60 = int_to_ptr.vmem [resolvable:$true] %s59
      %65 = dma.hbm_to_vmem [thread:$0]  %s5, 3072, %s60, [#allocation9], 64, 64, 4
    $region25: #{tpu_custom_call.1} parent=1 // pred_fallthru
      _
    // Predicated region
    $region26: #{tpu_custom_call.1} parent=1 // pred_check
      _
    $region27: #{tpu_custom_call.1} parent=1 // pred_check_branch
      %67 = sbr.rel (0) target = $region29
    $region28: #{tpu_custom_call.1} parent=1 // pred_region
      _
    $region29: #{tpu_custom_call.1} parent=1 // pred_fallthru
      _
    // Predicated region
    $region30: #{tpu_custom_call.1} parent=1 // pred_check
      _
    $region31: #{tpu_custom_call.1} parent=1 // pred_check_branch
      %69 = sbr.rel (0) target = $region33
    $region32: #{tpu_custom_call.1} parent=1 // pred_region
      %70 = dma.done [#allocation3], 64
    $region33: #{tpu_custom_call.1} parent=1 // pred_fallthru
      _
    // Predicated region
    $region34: #{tpu_custom_call.1} parent=1 // pred_check
      _
    $region35: #{tpu_custom_call.1} parent=1 // pred_check_branch
      %72 = sbr.rel (0) target = $region37
    $region36: #{tpu_custom_call.1} parent=1 // pred_region
      %73 = dma.done [#allocation6], 4096
    $region37: #{tpu_custom_call.1} parent=1 // pred_fallthru
      _
    // Predicated region
    $region38: #{tpu_custom_call.1} parent=1 // pred_check
      _
    $region39: #{tpu_custom_call.1} parent=1 // pred_check_branch
      %75 = sbr.rel (0) target = $region41
    $region40: #{tpu_custom_call.1} parent=1 // pred_region
      %76 = dma.done [#allocation6], 12288
    $region41: #{tpu_custom_call.1} parent=1 // pred_fallthru
      _
    // Predicated region
    $region42: #{tpu_custom_call.1} parent=1 // pred_check
      _
    $region43: #{tpu_custom_call.1} parent=1 // pred_check_branch
      %78 = sbr.rel (0) target = $region45
    $region44: #{tpu_custom_call.1} parent=1 // pred_region
      %79 = dma.done [#allocation9], 3072
    $region45: #{tpu_custom_call.1} parent=1 // pred_fallthru
      _
    %v81 = vld [vmem:[#allocation2] sm:$0xf]
    %v82 = vld [vmem:[#allocation5] sm:$0xff]
    %v83 = vld [vmem:[#allocation5 + $0x8] sm:$0xff]
    %v84 = vld [vmem:[#allocation5 + $0x10] sm:$0xff]
    %v85 = vld [vmem:[#allocation5 + $0x18] sm:$0xff]
    %v86 = vld [vmem:[#allocation5 + $0x20] sm:$0xff]
    %v87 = vld [vmem:[#allocation5 + $0x28] sm:$0xff]
    %v88 = vld [vmem:[#allocation5 + $0x30] sm:$0xff]
    %v89 = vld [vmem:[#allocation5 + $0x38] sm:$0xff]
    %v90 = vld [vmem:[#allocation5 + $0x40] sm:$0xff]
    %v91 = vld [vmem:[#allocation5 + $0x48] sm:$0xff]
    %v92 = vld [vmem:[#allocation5 + $0x50] sm:$0xff]
    %v93 = vld [vmem:[#allocation5 + $0x58] sm:$0xff]
    %v94 = vld [vmem:[#allocation5 + $0x60] sm:$0xff]
    %v95 = vld [vmem:[#allocation5 + $0x68] sm:$0xff]
    %v96 = vld [vmem:[#allocation5 + $0x70] sm:$0xff]
    %v97 = vld [vmem:[#allocation5 + $0x78] sm:$0xff]
    %v98 = vld [vmem:[#allocation5 + $0x80] sm:$0xff]
    %v99 = vld [vmem:[#allocation5 + $0x88] sm:$0xff]
    %v100 = vld [vmem:[#allocation5 + $0x90] sm:$0xff]
    %v101 = vld [vmem:[#allocation5 + $0x98] sm:$0xff]
    %v102 = vld [vmem:[#allocation5 + $0xa0] sm:$0xff]
    %v103 = vld [vmem:[#allocation5 + $0xa8] sm:$0xff]
    %v104 = vld [vmem:[#allocation5 + $0xb0] sm:$0xff]
    %v105 = vld [vmem:[#allocation5 + $0xb8] sm:$0xff]
    %v106 = vld [vmem:[#allocation5 + $0xc0] sm:$0xff]
    %v107 = vld [vmem:[#allocation5 + $0xc8] sm:$0xff]
    %v108 = vld [vmem:[#allocation5 + $0xd0] sm:$0xff]
    %v109 = vld [vmem:[#allocation5 + $0xd8] sm:$0xff]
    %v110 = vld [vmem:[#allocation5 + $0xe0] sm:$0xff]
    %v111 = vld [vmem:[#allocation5 + $0xe8] sm:$0xff]
    %v112 = vld [vmem:[#allocation5 + $0xf0] sm:$0xff]
    %v113 = vld [vmem:[#allocation5 + $0xf8] sm:$0xff]
    %v114 = vld [vmem:[%s2] sm:$0xf]
    %v116 = vlaneseq
    %v117 = vshrl.u32 %v116, 7
    %v118 = vsub.s32 0, %v117
    %v119 = vrot.slane %v114, %v118
    %v120 = vlaneseq
    %v121 = vshrl.u32 %v120, 7
    %v122 = vsub.s32 1, %v121
    %v123 = vrot.slane %v114, %v122
    %v124 = vlaneseq
    %v125 = vshrl.u32 %v124, 7
    %v126 = vsub.s32 2, %v125
    %v127 = vrot.slane %v114, %v126
    %v128 = vlaneseq
    %v129 = vshrl.u32 %v128, 7
    %v130 = vsub.s32 3, %v129
    %v131 = vrot.slane %v114, %v130
    %v168 = vunpack.c.l.b16 %v82
    %v169 = vunpack.c.h.b16 %v82
    %v170 = vunpack.c.l.b16 %v83
    %v171 = vunpack.c.h.b16 %v83
    %v172 = vunpack.c.l.b16 %v84
    %v173 = vunpack.c.h.b16 %v84
    %v174 = vunpack.c.l.b16 %v85
    %v175 = vunpack.c.h.b16 %v85
    %v176 = vunpack.c.l.b16 %v86
    %v177 = vunpack.c.h.b16 %v86
    %v178 = vunpack.c.l.b16 %v87
    %v179 = vunpack.c.h.b16 %v87
    %v180 = vunpack.c.l.b16 %v88
    %v181 = vunpack.c.h.b16 %v88
    %v182 = vunpack.c.l.b16 %v89
    %v183 = vunpack.c.h.b16 %v89
    %v184 = vunpack.c.l.b16 %v90
    %v185 = vunpack.c.h.b16 %v90
    %v186 = vunpack.c.l.b16 %v91
    %v187 = vunpack.c.h.b16 %v91
    %v188 = vunpack.c.l.b16 %v92
    %v189 = vunpack.c.h.b16 %v92
    %v190 = vunpack.c.l.b16 %v93
    %v191 = vunpack.c.h.b16 %v93
    %v192 = vunpack.c.l.b16 %v94
    %v193 = vunpack.c.h.b16 %v94
    %v194 = vunpack.c.l.b16 %v95
    %v195 = vunpack.c.h.b16 %v95
    %v196 = vunpack.c.l.b16 %v96
    %v197 = vunpack.c.h.b16 %v96
    %v198 = vunpack.c.l.b16 %v97
    %v199 = vunpack.c.h.b16 %v97
    %v200 = vunpack.c.l.b16 %v98
    %v201 = vunpack.c.h.b16 %v98
    %v202 = vunpack.c.l.b16 %v99
    %v203 = vunpack.c.h.b16 %v99
    %v204 = vunpack.c.l.b16 %v100
    %v205 = vunpack.c.h.b16 %v100
    %v206 = vunpack.c.l.b16 %v101
    %v207 = vunpack.c.h.b16 %v101
    %v208 = vunpack.c.l.b16 %v102
    %v209 = vunpack.c.h.b16 %v102
    %v210 = vunpack.c.l.b16 %v103
    %v211 = vunpack.c.h.b16 %v103
    %v212 = vunpack.c.l.b16 %v104
    %v213 = vunpack.c.h.b16 %v104
    %v214 = vunpack.c.l.b16 %v105
    %v215 = vunpack.c.h.b16 %v105
    %v216 = vunpack.c.l.b16 %v106
    %v217 = vunpack.c.h.b16 %v106
    %v218 = vunpack.c.l.b16 %v107
    %v219 = vunpack.c.h.b16 %v107
    %v220 = vunpack.c.l.b16 %v108
    %v221 = vunpack.c.h.b16 %v108
    %v222 = vunpack.c.l.b16 %v109
    %v223 = vunpack.c.h.b16 %v109
    %v224 = vunpack.c.l.b16 %v110
    %v225 = vunpack.c.h.b16 %v110
    %v226 = vunpack.c.l.b16 %v111
    %v227 = vunpack.c.h.b16 %v111
    %v228 = vunpack.c.l.b16 %v112
    %v229 = vunpack.c.h.b16 %v112
    %v230 = vunpack.c.l.b16 %v113
    %v231 = vunpack.c.h.b16 %v113
    %v232 = vpack.c.b16 %v172, %v168
    %v233 = vpack.c.b16 %v173, %v169
    %v234 = vpack.c.b16 %v174, %v170
    %v235 = vpack.c.b16 %v175, %v171
    %v236 = vpack.c.b16 %v180, %v176
    %v237 = vpack.c.b16 %v181, %v177
    %v238 = vpack.c.b16 %v182, %v178
    %v239 = vpack.c.b16 %v183, %v179
    %v240 = vpack.c.b16 %v188, %v184
    %v241 = vpack.c.b16 %v189, %v185
    %v242 = vpack.c.b16 %v190, %v186
    %v243 = vpack.c.b16 %v191, %v187
    %v244 = vpack.c.b16 %v196, %v192
    %v245 = vpack.c.b16 %v197, %v193
    %v246 = vpack.c.b16 %v198, %v194
    %v247 = vpack.c.b16 %v199, %v195
    %v248 = vpack.c.b16 %v204, %v200
    %v249 = vpack.c.b16 %v205, %v201
    %v250 = vpack.c.b16 %v206, %v202
    %v251 = vpack.c.b16 %v207, %v203
    %v252 = vpack.c.b16 %v212, %v208
    %v253 = vpack.c.b16 %v213, %v209
    %v254 = vpack.c.b16 %v214, %v210
    %v255 = vpack.c.b16 %v215, %v211
    %v256 = vpack.c.b16 %v220, %v216
    %v257 = vpack.c.b16 %v221, %v217
    %v258 = vpack.c.b16 %v222, %v218
    %v259 = vpack.c.b16 %v223, %v219
    %v260 = vpack.c.b16 %v228, %v224
    %v261 = vpack.c.b16 %v229, %v225
    %v262 = vpack.c.b16 %v230, %v226
    %v263 = vpack.c.b16 %v231, %v227
    %296 = vmatprep.subr.bf16.mxu0 %v233
    %297 = vmatpush1.bf16.msra.mxu0 %v232
    %298 = vmatprep.subr.bf16.mxu0 %v237
    %299 = vmatpush1.bf16.msra.mxu0 %v236
    %300 = vmatprep.subr.bf16.mxu0 %v241
    %301 = vmatpush1.bf16.msra.mxu0 %v240
    %302 = vmatprep.subr.bf16.mxu0 %v245
    %303 = vmatpush1.bf16.msra.mxu0 %v244
    %304 = vmatprep.subr.bf16.mxu0 %v249
    %305 = vmatpush1.bf16.msra.mxu0 %v248
    %306 = vmatprep.subr.bf16.mxu0 %v253
    %307 = vmatpush1.bf16.msra.mxu0 %v252
    %308 = vmatprep.subr.bf16.mxu0 %v257
    %309 = vmatpush1.bf16.msra.mxu0 %v256
    %310 = vmatprep.subr.bf16.mxu0 %v261
    %311 = vmatpush1.bf16.msra.mxu0 %v260
    %312 = vmatprep.subr.bf16.mxu0 0
    %313 = vmatpush1.bf16.msra.mxu0 0
    %314 = vmatprep.subr.bf16.mxu0 0
    %315 = vmatpush1.bf16.msra.mxu0 0
    %316 = vmatprep.subr.bf16.mxu0 0
    %317 = vmatpush1.bf16.msra.mxu0 0
    %318 = vmatprep.subr.bf16.mxu0 0
    %319 = vmatpush1.bf16.msra.mxu0 0
    %320 = vmatprep.subr.bf16.mxu0 0
    %321 = vmatpush1.bf16.msra.mxu0 0
    %322 = vmatprep.subr.bf16.mxu0 0
    %323 = vmatpush1.bf16.msra.mxu0 0
    %324 = vmatprep.subr.bf16.mxu0 0
    %325 = vmatpush1.bf16.msra.mxu0 0
    %326 = vmatprep.subr.bf16.mxu0 0
    %327 = vmatpush1.bf16.msra.mxu0 0
    %328 = vmatprep.mubr.bf16.mxu0 0
    %329 = vmatmul.mubr.bf16.gmra.mrb[0].mxu0 %v81
    %v330 = vpop.f32.mrb[0].mxu0
    %v331 = vadd.f32 %v119, %v330
    %v332 = vpop.f32.mrb[0].mxu0
    %v333 = vadd.f32 %v123, %v332
    %v334 = vpop.f32.mrb[0].mxu0
    %v335 = vpop.f32.mrb[0].mxu0
    %336 = vdwg.mxu0
    %337 = vmatprep.subr.bf16.mxu0 %v235
    %338 = vmatpush1.bf16.msra.mxu0 %v234
    %339 = vmatprep.subr.bf16.mxu0 %v239
    %340 = vmatpush1.bf16.msra.mxu0 %v238
    %341 = vmatprep.subr.bf16.mxu0 %v243
    %342 = vmatpush1.bf16.msra.mxu0 %v242
    %343 = vmatprep.subr.bf16.mxu0 %v247
    %344 = vmatpush1.bf16.msra.mxu0 %v246
    %345 = vmatprep.subr.bf16.mxu0 %v251
    %346 = vmatpush1.bf16.msra.mxu0 %v250
    %347 = vmatprep.subr.bf16.mxu0 %v255
    %348 = vmatpush1.bf16.msra.mxu0 %v254
    %349 = vmatprep.subr.bf16.mxu0 %v259
    %350 = vmatpush1.bf16.msra.mxu0 %v258
    %351 = vmatprep.subr.bf16.mxu0 %v263
    %352 = vmatpush1.bf16.msra.mxu0 %v262
    %353 = vmatprep.subr.bf16.mxu0 0
    %354 = vmatpush1.bf16.msra.mxu0 0
    %355 = vmatprep.subr.bf16.mxu0 0
    %356 = vmatpush1.bf16.msra.mxu0 0
    %357 = vmatprep.subr.bf16.mxu0 0
    %358 = vmatpush1.bf16.msra.mxu0 0
    %359 = vmatprep.subr.bf16.mxu0 0
    %360 = vmatpush1.bf16.msra.mxu0 0
    %361 = vmatprep.subr.bf16.mxu0 0
    %362 = vmatpush1.bf16.msra.mxu0 0
    %363 = vmatprep.subr.bf16.mxu0 0
    %364 = vmatpush1.bf16.msra.mxu0 0
    %365 = vmatprep.subr.bf16.mxu0 0
    %366 = vmatpush1.bf16.msra.mxu0 0
    %367 = vmatprep.subr.bf16.mxu0 0
    %368 = vmatpush1.bf16.msra.mxu0 0
    %369 = vmatprep.mubr.bf16.mxu0 0
    %370 = vmatmul.mubr.bf16.gmra.mrb[0].mxu0 %v81
    %v371 = vpop.f32.mrb[0].mxu0
    %v372 = vadd.f32 %v127, %v371
    %v373 = vpop.f32.mrb[0].mxu0
    %v374 = vadd.f32 %v131, %v373
    %v375 = vpop.f32.mrb[0].mxu0
    %v376 = vpop.f32.mrb[0].mxu0
    %377 = vdwg.mxu0
    %vm378 = vcmp.ge.f32.partialorder %v331, 0.0
    %vm379 = vcmp.ge.f32.partialorder %v333, 0.0
    %vm380 = vcmp.ge.f32.partialorder %v372, 0.0
    %vm381 = vcmp.ge.f32.partialorder %v374, 0.0
    %v382 = vmul.f32 %v331, 0.01
    %v383 = vmul.f32 %v333, 0.01
    %v384 = vmul.f32 %v372, 0.01
    %v385 = vmul.f32 %v374, 0.01
    %v386 = vsel %vm378, %v331, %v382
    %v387 = vsel %vm379, %v333, %v383
    %v388 = vsel %vm380, %v372, %v384
    %v389 = vsel %vm381, %v374, %v385
    %v390 = vpack.c.bf16 %v386, %v386
    %v391 = vpack.c.bf16 %v387, %v387
    %v392 = vpack.c.bf16 %v388, %v388
    %v393 = vpack.c.bf16 %v389, %v389
    %v394 = vld [vmem:[#allocation7] sm:$0xff]
    %v395 = vld [vmem:[#allocation7 + $0x8] sm:$0xf]
    %v396 = vld [vmem:[#allocation7 + $0xc] sm:$0xff]
    %v397 = vld [vmem:[#allocation7 + $0x14] sm:$0xf]
    %v398 = vld [vmem:[#allocation7 + $0x18] sm:$0xff]
    %v399 = vld [vmem:[#allocation7 + $0x20] sm:$0xf]
    %v400 = vld [vmem:[#allocation7 + $0x24] sm:$0xff]
    %v401 = vld [vmem:[#allocation7 + $0x2c] sm:$0xf]
    %v402 = vld [vmem:[#allocation7 + $0x30] sm:$0xff]
    %v403 = vld [vmem:[#allocation7 + $0x38] sm:$0xf]
    %v404 = vld [vmem:[#allocation7 + $0x3c] sm:$0xff]
    %v405 = vld [vmem:[#allocation7 + $0x44] sm:$0xf]
    %v406 = vld [vmem:[#allocation7 + $0x48] sm:$0xff]
    %v407 = vld [vmem:[#allocation7 + $0x50] sm:$0xf]
    %v408 = vld [vmem:[#allocation7 + $0x54] sm:$0xff]
    %v409 = vld [vmem:[#allocation7 + $0x5c] sm:$0xf]
    %v410 = vld [vmem:[#allocation7 + $0x60] sm:$0xff]
    %v411 = vld [vmem:[#allocation7 + $0x68] sm:$0xf]
    %v412 = vld [vmem:[#allocation7 + $0x6c] sm:$0xff]
    %v413 = vld [vmem:[#allocation7 + $0x74] sm:$0xf]
    %v414 = vld [vmem:[#allocation7 + $0x78] sm:$0xff]
    %v415 = vld [vmem:[#allocation7 + $0x80] sm:$0xf]
    %v416 = vld [vmem:[#allocation7 + $0x84] sm:$0xff]
    %v417 = vld [vmem:[#allocation7 + $0x8c] sm:$0xf]
    %v418 = vld [vmem:[#allocation7 + $0x90] sm:$0xff]
    %v419 = vld [vmem:[#allocation7 + $0x98] sm:$0xf]
    %v420 = vld [vmem:[#allocation7 + $0x9c] sm:$0xff]
    %v421 = vld [vmem:[#allocation7 + $0xa4] sm:$0xf]
    %v422 = vld [vmem:[#allocation7 + $0xa8] sm:$0xff]
    %v423 = vld [vmem:[#allocation7 + $0xb0] sm:$0xf]
    %v424 = vld [vmem:[#allocation7 + $0xb4] sm:$0xff]
    %v425 = vld [vmem:[#allocation7 + $0xbc] sm:$0xf]
    %v426 = vld [vmem:[#allocation7 + $0xc0] sm:$0xff]
    %v427 = vld [vmem:[#allocation7 + $0xc8] sm:$0xf]
    %v428 = vld [vmem:[#allocation7 + $0xcc] sm:$0xff]
    %v429 = vld [vmem:[#allocation7 + $0xd4] sm:$0xf]
    %v430 = vld [vmem:[#allocation7 + $0xd8] sm:$0xff]
    %v431 = vld [vmem:[#allocation7 + $0xe0] sm:$0xf]
    %v432 = vld [vmem:[#allocation7 + $0xe4] sm:$0xff]
    %v433 = vld [vmem:[#allocation7 + $0xec] sm:$0xf]
    %v434 = vld [vmem:[#allocation7 + $0xf0] sm:$0xff]
    %v435 = vld [vmem:[#allocation7 + $0xf8] sm:$0xf]
    %v436 = vld [vmem:[#allocation7 + $0xfc] sm:$0xff]
    %v437 = vld [vmem:[#allocation7 + $0x104] sm:$0xf]
    %v438 = vld [vmem:[#allocation7 + $0x108] sm:$0xff]
    %v439 = vld [vmem:[#allocation7 + $0x110] sm:$0xf]
    %v440 = vld [vmem:[#allocation7 + $0x114] sm:$0xff]
    %v441 = vld [vmem:[#allocation7 + $0x11c] sm:$0xf]
    %v442 = vld [vmem:[#allocation7 + $0x120] sm:$0xff]
    %v443 = vld [vmem:[#allocation7 + $0x128] sm:$0xf]
    %v444 = vld [vmem:[#allocation7 + $0x12c] sm:$0xff]
    %v445 = vld [vmem:[#allocation7 + $0x134] sm:$0xf]
    %v446 = vld [vmem:[#allocation7 + $0x138] sm:$0xff]
    %v447 = vld [vmem:[#allocation7 + $0x140] sm:$0xf]
    %v448 = vld [vmem:[#allocation7 + $0x144] sm:$0xff]
    %v449 = vld [vmem:[#allocation7 + $0x14c] sm:$0xf]
    %v450 = vld [vmem:[#allocation7 + $0x150] sm:$0xff]
    %v451 = vld [vmem:[#allocation7 + $0x158] sm:$0xf]
    %v452 = vld [vmem:[#allocation7 + $0x15c] sm:$0xff]
    %v453 = vld [vmem:[#allocation7 + $0x164] sm:$0xf]
    %v454 = vld [vmem:[#allocation7 + $0x168] sm:$0xff]
    %v455 = vld [vmem:[#allocation7 + $0x170] sm:$0xf]
    %v456 = vld [vmem:[#allocation7 + $0x174] sm:$0xff]
    %v457 = vld [vmem:[#allocation7 + $0x17c] sm:$0xf]
    %v458 = vld [vmem:[#allocation7 + $0x180] sm:$0xff]
    %v459 = vld [vmem:[#allocation7 + $0x188] sm:$0xf]
    %v460 = vld [vmem:[#allocation7 + $0x18c] sm:$0xff]
    %v461 = vld [vmem:[#allocation7 + $0x194] sm:$0xf]
    %v462 = vld [vmem:[#allocation7 + $0x198] sm:$0xff]
    %v463 = vld [vmem:[#allocation7 + $0x1a0] sm:$0xf]
    %v464 = vld [vmem:[#allocation7 + $0x1a4] sm:$0xff]
    %v465 = vld [vmem:[#allocation7 + $0x1ac] sm:$0xf]
    %v466 = vld [vmem:[#allocation7 + $0x1b0] sm:$0xff]
    %v467 = vld [vmem:[#allocation7 + $0x1b8] sm:$0xf]
    %v468 = vld [vmem:[#allocation7 + $0x1bc] sm:$0xff]
    %v469 = vld [vmem:[#allocation7 + $0x1c4] sm:$0xf]
    %v470 = vld [vmem:[#allocation7 + $0x1c8] sm:$0xff]
    %v471 = vld [vmem:[#allocation7 + $0x1d0] sm:$0xf]
    %v472 = vld [vmem:[#allocation7 + $0x1d4] sm:$0xff]
    %v473 = vld [vmem:[#allocation7 + $0x1dc] sm:$0xf]
    %v474 = vld [vmem:[#allocation7 + $0x1e0] sm:$0xff]
    %v475 = vld [vmem:[#allocation7 + $0x1e8] sm:$0xf]
    %v476 = vld [vmem:[#allocation7 + $0x1ec] sm:$0xff]
    %v477 = vld [vmem:[#allocation7 + $0x1f4] sm:$0xf]
    %v478 = vld [vmem:[#allocation7 + $0x1f8] sm:$0xff]
    %v479 = vld [vmem:[#allocation7 + $0x200] sm:$0xf]
    %v480 = vld [vmem:[#allocation7 + $0x204] sm:$0xff]
    %v481 = vld [vmem:[#allocation7 + $0x20c] sm:$0xf]
    %v482 = vld [vmem:[#allocation7 + $0x210] sm:$0xff]
    %v483 = vld [vmem:[#allocation7 + $0x218] sm:$0xf]
    %v484 = vld [vmem:[#allocation7 + $0x21c] sm:$0xff]
    %v485 = vld [vmem:[#allocation7 + $0x224] sm:$0xf]
    %v486 = vld [vmem:[#allocation7 + $0x228] sm:$0xff]
    %v487 = vld [vmem:[#allocation7 + $0x230] sm:$0xf]
    %v488 = vld [vmem:[#allocation7 + $0x234] sm:$0xff]
    %v489 = vld [vmem:[#allocation7 + $0x23c] sm:$0xf]
    %v490 = vld [vmem:[#allocation7 + $0x240] sm:$0xff]
    %v491 = vld [vmem:[#allocation7 + $0x248] sm:$0xf]
    %v492 = vld [vmem:[#allocation7 + $0x24c] sm:$0xff]
    %v493 = vld [vmem:[#allocation7 + $0x254] sm:$0xf]
    %v494 = vld [vmem:[#allocation7 + $0x258] sm:$0xff]
    %v495 = vld [vmem:[#allocation7 + $0x260] sm:$0xf]
    %v496 = vld [vmem:[#allocation7 + $0x264] sm:$0xff]
    %v497 = vld [vmem:[#allocation7 + $0x26c] sm:$0xf]
    %v498 = vld [vmem:[#allocation7 + $0x270] sm:$0xff]
    %v499 = vld [vmem:[#allocation7 + $0x278] sm:$0xf]
    %v500 = vld [vmem:[#allocation7 + $0x27c] sm:$0xff]
    %v501 = vld [vmem:[#allocation7 + $0x284] sm:$0xf]
    %v502 = vld [vmem:[#allocation7 + $0x288] sm:$0xff]
    %v503 = vld [vmem:[#allocation7 + $0x290] sm:$0xf]
    %v504 = vld [vmem:[#allocation7 + $0x294] sm:$0xff]
    %v505 = vld [vmem:[#allocation7 + $0x29c] sm:$0xf]
    %v506 = vld [vmem:[#allocation7 + $0x2a0] sm:$0xff]
    %v507 = vld [vmem:[#allocation7 + $0x2a8] sm:$0xf]
    %v508 = vld [vmem:[#allocation7 + $0x2ac] sm:$0xff]
    %v509 = vld [vmem:[#allocation7 + $0x2b4] sm:$0xf]
    %v510 = vld [vmem:[#allocation7 + $0x2b8] sm:$0xff]
    %v511 = vld [vmem:[#allocation7 + $0x2c0] sm:$0xf]
    %v512 = vld [vmem:[#allocation7 + $0x2c4] sm:$0xff]
    %v513 = vld [vmem:[#allocation7 + $0x2cc] sm:$0xf]
    %v514 = vld [vmem:[#allocation7 + $0x2d0] sm:$0xff]
    %v515 = vld [vmem:[#allocation7 + $0x2d8] sm:$0xf]
    %v516 = vld [vmem:[#allocation7 + $0x2dc] sm:$0xff]
    %v517 = vld [vmem:[#allocation7 + $0x2e4] sm:$0xf]
    %v518 = vld [vmem:[#allocation7 + $0x2e8] sm:$0xff]
    %v519 = vld [vmem:[#allocation7 + $0x2f0] sm:$0xf]
    %v520 = vld [vmem:[#allocation7 + $0x2f4] sm:$0xff]
    %v521 = vld [vmem:[#allocation7 + $0x2fc] sm:$0xf]
    %v522 = vld [vmem:[%s4] sm:$0x7]
    %v524 = vlaneseq
    %v525 = vshrl.u32 %v524, 7
    %v526 = vsub.s32 0, %v525
    %v527 = vrot.slane %v522, %v526
    %v528 = vlaneseq
    %v529 = vshrl.u32 %v528, 7
    %v530 = vsub.s32 1, %v529
    %v531 = vrot.slane %v522, %v530
    %v532 = vlaneseq
    %v533 = vshrl.u32 %v532, 7
    %v534 = vsub.s32 2, %v533
    %v535 = vrot.slane %v522, %v534
    %v667 = vunpack.c.l.b16 %v394
    %v668 = vunpack.c.h.b16 %v394
    %v669 = vunpack.c.l.b16 %v395
    %v670 = vunpack.c.l.b16 %v396
    %v671 = vunpack.c.h.b16 %v396
    %v672 = vunpack.c.l.b16 %v397
    %v673 = vunpack.c.l.b16 %v398
    %v674 = vunpack.c.h.b16 %v398
    %v675 = vunpack.c.l.b16 %v399
    %v676 = vunpack.c.l.b16 %v400
    %v677 = vunpack.c.h.b16 %v400
    %v678 = vunpack.c.l.b16 %v401
    %v679 = vunpack.c.l.b16 %v402
    %v680 = vunpack.c.h.b16 %v402
    %v681 = vunpack.c.l.b16 %v403
    %v682 = vunpack.c.l.b16 %v404
    %v683 = vunpack.c.h.b16 %v404
    %v684 = vunpack.c.l.b16 %v405
    %v685 = vunpack.c.l.b16 %v406
    %v686 = vunpack.c.h.b16 %v406
    %v687 = vunpack.c.l.b16 %v407
    %v688 = vunpack.c.l.b16 %v408
    %v689 = vunpack.c.h.b16 %v408
    %v690 = vunpack.c.l.b16 %v409
    %v691 = vunpack.c.l.b16 %v410
    %v692 = vunpack.c.h.b16 %v410
    %v693 = vunpack.c.l.b16 %v411
    %v694 = vunpack.c.l.b16 %v412
    %v695 = vunpack.c.h.b16 %v412
    %v696 = vunpack.c.l.b16 %v413
    %v697 = vunpack.c.l.b16 %v414
    %v698 = vunpack.c.h.b16 %v414
    %v699 = vunpack.c.l.b16 %v415
    %v700 = vunpack.c.l.b16 %v416
    %v701 = vunpack.c.h.b16 %v416
    %v702 = vunpack.c.l.b16 %v417
    %v703 = vunpack.c.l.b16 %v418
    %v704 = vunpack.c.h.b16 %v418
    %v705 = vunpack.c.l.b16 %v419
    %v706 = vunpack.c.l.b16 %v420
    %v707 = vunpack.c.h.b16 %v420
    %v708 = vunpack.c.l.b16 %v421
    %v709 = vunpack.c.l.b16 %v422
    %v710 = vunpack.c.h.b16 %v422
    %v711 = vunpack.c.l.b16 %v423
    %v712 = vunpack.c.l.b16 %v424
    %v713 = vunpack.c.h.b16 %v424
    %v714 = vunpack.c.l.b16 %v425
    %v715 = vunpack.c.l.b16 %v426
    %v716 = vunpack.c.h.b16 %v426
    %v717 = vunpack.c.l.b16 %v427
    %v718 = vunpack.c.l.b16 %v428
    %v719 = vunpack.c.h.b16 %v428
    %v720 = vunpack.c.l.b16 %v429
    %v721 = vunpack.c.l.b16 %v430
    %v722 = vunpack.c.h.b16 %v430
    %v723 = vunpack.c.l.b16 %v431
    %v724 = vunpack.c.l.b16 %v432
    %v725 = vunpack.c.h.b16 %v432
    %v726 = vunpack.c.l.b16 %v433
    %v727 = vunpack.c.l.b16 %v434
    %v728 = vunpack.c.h.b16 %v434
    %v729 = vunpack.c.l.b16 %v435
    %v730 = vunpack.c.l.b16 %v436
    %v731 = vunpack.c.h.b16 %v436
    %v732 = vunpack.c.l.b16 %v437
    %v733 = vunpack.c.l.b16 %v438
    %v734 = vunpack.c.h.b16 %v438
    %v735 = vunpack.c.l.b16 %v439
    %v736 = vunpack.c.l.b16 %v440
    %v737 = vunpack.c.h.b16 %v440
    %v738 = vunpack.c.l.b16 %v441
    %v739 = vunpack.c.l.b16 %v442
    %v740 = vunpack.c.h.b16 %v442
    %v741 = vunpack.c.l.b16 %v443
    %v742 = vunpack.c.l.b16 %v444
    %v743 = vunpack.c.h.b16 %v444
    %v744 = vunpack.c.l.b16 %v445
    %v745 = vunpack.c.l.b16 %v446
    %v746 = vunpack.c.h.b16 %v446
    %v747 = vunpack.c.l.b16 %v447
    %v748 = vunpack.c.l.b16 %v448
    %v749 = vunpack.c.h.b16 %v448
    %v750 = vunpack.c.l.b16 %v449
    %v751 = vunpack.c.l.b16 %v450
    %v752 = vunpack.c.h.b16 %v450
    %v753 = vunpack.c.l.b16 %v451
    %v754 = vunpack.c.l.b16 %v452
    %v755 = vunpack.c.h.b16 %v452
    %v756 = vunpack.c.l.b16 %v453
    %v757 = vunpack.c.l.b16 %v454
    %v758 = vunpack.c.h.b16 %v454
    %v759 = vunpack.c.l.b16 %v455
    %v760 = vunpack.c.l.b16 %v456
    %v761 = vunpack.c.h.b16 %v456
    %v762 = vunpack.c.l.b16 %v457
    %v763 = vunpack.c.l.b16 %v458
    %v764 = vunpack.c.h.b16 %v458
    %v765 = vunpack.c.l.b16 %v459
    %v766 = vunpack.c.l.b16 %v460
    %v767 = vunpack.c.h.b16 %v460
    %v768 = vunpack.c.l.b16 %v461
    %v769 = vunpack.c.l.b16 %v462
    %v770 = vunpack.c.h.b16 %v462
    %v771 = vunpack.c.l.b16 %v463
    %v772 = vunpack.c.l.b16 %v464
    %v773 = vunpack.c.h.b16 %v464
    %v774 = vunpack.c.l.b16 %v465
    %v775 = vunpack.c.l.b16 %v466
    %v776 = vunpack.c.h.b16 %v466
    %v777 = vunpack.c.l.b16 %v467
    %v778 = vunpack.c.l.b16 %v468
    %v779 = vunpack.c.h.b16 %v468
    %v780 = vunpack.c.l.b16 %v469
    %v781 = vunpack.c.l.b16 %v470
    %v782 = vunpack.c.h.b16 %v470
    %v783 = vunpack.c.l.b16 %v471
    %v784 = vunpack.c.l.b16 %v472
    %v785 = vunpack.c.h.b16 %v472
    %v786 = vunpack.c.l.b16 %v473
    %v787 = vunpack.c.l.b16 %v474
    %v788 = vunpack.c.h.b16 %v474
    %v789 = vunpack.c.l.b16 %v475
    %v790 = vunpack.c.l.b16 %v476
    %v791 = vunpack.c.h.b16 %v476
    %v792 = vunpack.c.l.b16 %v477
    %v793 = vunpack.c.l.b16 %v478
    %v794 = vunpack.c.h.b16 %v478
    %v795 = vunpack.c.l.b16 %v479
    %v796 = vunpack.c.l.b16 %v480
    %v797 = vunpack.c.h.b16 %v480
    %v798 = vunpack.c.l.b16 %v481
    %v799 = vunpack.c.l.b16 %v482
    %v800 = vunpack.c.h.b16 %v482
    %v801 = vunpack.c.l.b16 %v483
    %v802 = vunpack.c.l.b16 %v484
    %v803 = vunpack.c.h.b16 %v484
    %v804 = vunpack.c.l.b16 %v485
    %v805 = vunpack.c.l.b16 %v486
    %v806 = vunpack.c.h.b16 %v486
    %v807 = vunpack.c.l.b16 %v487
    %v808 = vunpack.c.l.b16 %v488
    %v809 = vunpack.c.h.b16 %v488
    %v810 = vunpack.c.l.b16 %v489
    %v811 = vunpack.c.l.b16 %v490
    %v812 = vunpack.c.h.b16 %v490
    %v813 = vunpack.c.l.b16 %v491
    %v814 = vunpack.c.l.b16 %v492
    %v815 = vunpack.c.h.b16 %v492
    %v816 = vunpack.c.l.b16 %v493
    %v817 = vunpack.c.l.b16 %v494
    %v818 = vunpack.c.h.b16 %v494
    %v819 = vunpack.c.l.b16 %v495
    %v820 = vunpack.c.l.b16 %v496
    %v821 = vunpack.c.h.b16 %v496
    %v822 = vunpack.c.l.b16 %v497
    %v823 = vunpack.c.l.b16 %v498
    %v824 = vunpack.c.h.b16 %v498
    %v825 = vunpack.c.l.b16 %v499
    %v826 = vunpack.c.l.b16 %v500
    %v827 = vunpack.c.h.b16 %v500
    %v828 = vunpack.c.l.b16 %v501
    %v829 = vunpack.c.l.b16 %v502
    %v830 = vunpack.c.h.b16 %v502
    %v831 = vunpack.c.l.b16 %v503
    %v832 = vunpack.c.l.b16 %v504
    %v833 = vunpack.c.h.b16 %v504
    %v834 = vunpack.c.l.b16 %v505
    %v835 = vunpack.c.l.b16 %v506
    %v836 = vunpack.c.h.b16 %v506
    %v837 = vunpack.c.l.b16 %v507
    %v838 = vunpack.c.l.b16 %v508
    %v839 = vunpack.c.h.b16 %v508
    %v840 = vunpack.c.l.b16 %v509
    %v841 = vunpack.c.l.b16 %v510
    %v842 = vunpack.c.h.b16 %v510
    %v843 = vunpack.c.l.b16 %v511
    %v844 = vunpack.c.l.b16 %v512
    %v845 = vunpack.c.h.b16 %v512
    %v846 = vunpack.c.l.b16 %v513
    %v847 = vunpack.c.l.b16 %v514
    %v848 = vunpack.c.h.b16 %v514
    %v849 = vunpack.c.l.b16 %v515
    %v850 = vunpack.c.l.b16 %v516
    %v851 = vunpack.c.h.b16 %v516
    %v852 = vunpack.c.l.b16 %v517
    %v853 = vunpack.c.l.b16 %v518
    %v854 = vunpack.c.h.b16 %v518
    %v855 = vunpack.c.l.b16 %v519
    %v856 = vunpack.c.l.b16 %v520
    %v857 = vunpack.c.h.b16 %v520
    %v858 = vunpack.c.l.b16 %v521
    %v859 = vpack.c.b16 %v670, %v667
    %v860 = vpack.c.b16 %v671, %v668
    %v861 = vpack.c.b16 %v672, %v669
    %v862 = vpack.c.b16 %v676, %v673
    %v863 = vpack.c.b16 %v677, %v674
    %v864 = vpack.c.b16 %v678, %v675
    %v865 = vpack.c.b16 %v682, %v679
    %v866 = vpack.c.b16 %v683, %v680
    %v867 = vpack.c.b16 %v684, %v681
    %v868 = vpack.c.b16 %v688, %v685
    %v869 = vpack.c.b16 %v689, %v686
    %v870 = vpack.c.b16 %v690, %v687
    %v871 = vpack.c.b16 %v694, %v691
    %v872 = vpack.c.b16 %v695, %v692
    %v873 = vpack.c.b16 %v696, %v693
    %v874 = vpack.c.b16 %v700, %v697
    %v875 = vpack.c.b16 %v701, %v698
    %v876 = vpack.c.b16 %v702, %v699
    %v877 = vpack.c.b16 %v706, %v703
    %v878 = vpack.c.b16 %v707, %v704
    %v879 = vpack.c.b16 %v708, %v705
    %v880 = vpack.c.b16 %v712, %v709
    %v881 = vpack.c.b16 %v713, %v710
    %v882 = vpack.c.b16 %v714, %v711
    %v883 = vpack.c.b16 %v718, %v715
    %v884 = vpack.c.b16 %v719, %v716
    %v885 = vpack.c.b16 %v720, %v717
    %v886 = vpack.c.b16 %v724, %v721
    %v887 = vpack.c.b16 %v725, %v722
    %v888 = vpack.c.b16 %v726, %v723
    %v889 = vpack.c.b16 %v730, %v727
    %v890 = vpack.c.b16 %v731, %v728
    %v891 = vpack.c.b16 %v732, %v729
    %v892 = vpack.c.b16 %v736, %v733
    %v893 = vpack.c.b16 %v737, %v734
    %v894 = vpack.c.b16 %v738, %v735
    %v895 = vpack.c.b16 %v742, %v739
    %v896 = vpack.c.b16 %v743, %v740
    %v897 = vpack.c.b16 %v744, %v741
    %v898 = vpack.c.b16 %v748, %v745
    %v899 = vpack.c.b16 %v749, %v746
    %v900 = vpack.c.b16 %v750, %v747
    %v901 = vpack.c.b16 %v754, %v751
    %v902 = vpack.c.b16 %v755, %v752
    %v903 = vpack.c.b16 %v756, %v753
    %v904 = vpack.c.b16 %v760, %v757
    %v905 = vpack.c.b16 %v761, %v758
    %v906 = vpack.c.b16 %v762, %v759
    %v907 = vpack.c.b16 %v766, %v763
    %v908 = vpack.c.b16 %v767, %v764
    %v909 = vpack.c.b16 %v768, %v765
    %v910 = vpack.c.b16 %v772, %v769
    %v911 = vpack.c.b16 %v773, %v770
    %v912 = vpack.c.b16 %v774, %v771
    %v913 = vpack.c.b16 %v778, %v775
    %v914 = vpack.c.b16 %v779, %v776
    %v915 = vpack.c.b16 %v780, %v777
    %v916 = vpack.c.b16 %v784, %v781
    %v917 = vpack.c.b16 %v785, %v782
    %v918 = vpack.c.b16 %v786, %v783
    %v919 = vpack.c.b16 %v790, %v787
    %v920 = vpack.c.b16 %v791, %v788
    %v921 = vpack.c.b16 %v792, %v789
    %v922 = vpack.c.b16 %v796, %v793
    %v923 = vpack.c.b16 %v797, %v794
    %v924 = vpack.c.b16 %v798, %v795
    %v925 = vpack.c.b16 %v802, %v799
    %v926 = vpack.c.b16 %v803, %v800
    %v927 = vpack.c.b16 %v804, %v801
    %v928 = vpack.c.b16 %v808, %v805
    %v929 = vpack.c.b16 %v809, %v806
    %v930 = vpack.c.b16 %v810, %v807
    %v931 = vpack.c.b16 %v814, %v811
    %v932 = vpack.c.b16 %v815, %v812
    %v933 = vpack.c.b16 %v816, %v813
    %v934 = vpack.c.b16 %v820, %v817
    %v935 = vpack.c.b16 %v821, %v818
    %v936 = vpack.c.b16 %v822, %v819
    %v937 = vpack.c.b16 %v826, %v823
    %v938 = vpack.c.b16 %v827, %v824
    %v939 = vpack.c.b16 %v828, %v825
    %v940 = vpack.c.b16 %v832, %v829
    %v941 = vpack.c.b16 %v833, %v830
    %v942 = vpack.c.b16 %v834, %v831
    %v943 = vpack.c.b16 %v838, %v835
    %v944 = vpack.c.b16 %v839, %v836
    %v945 = vpack.c.b16 %v840, %v837
    %v946 = vpack.c.b16 %v844, %v841
    %v947 = vpack.c.b16 %v845, %v842
    %v948 = vpack.c.b16 %v846, %v843
    %v949 = vpack.c.b16 %v850, %v847
    %v950 = vpack.c.b16 %v851, %v848
    %v951 = vpack.c.b16 %v852, %v849
    %v952 = vpack.c.b16 %v856, %v853
    %v953 = vpack.c.b16 %v857, %v854
    %v954 = vpack.c.b16 %v858, %v855
    %1051 = vmatprep.subr.bf16.mxu0 %v860
    %1052 = vmatpush1.bf16.msra.mxu0 %v859
    %1053 = vmatprep.subr.bf16.mxu0 %v863
    %1054 = vmatpush1.bf16.msra.mxu0 %v862
    %1055 = vmatprep.subr.bf16.mxu0 %v866
    %1056 = vmatpush1.bf16.msra.mxu0 %v865
    %1057 = vmatprep.subr.bf16.mxu0 %v869
    %1058 = vmatpush1.bf16.msra.mxu0 %v868
    %1059 = vmatprep.subr.bf16.mxu0 %v872
    %1060 = vmatpush1.bf16.msra.mxu0 %v871
    %1061 = vmatprep.subr.bf16.mxu0 %v875
    %1062 = vmatpush1.bf16.msra.mxu0 %v874
    %1063 = vmatprep.subr.bf16.mxu0 %v878
    %1064 = vmatpush1.bf16.msra.mxu0 %v877
    %1065 = vmatprep.subr.bf16.mxu0 %v881
    %1066 = vmatpush1.bf16.msra.mxu0 %v880
    %1067 = vmatprep.subr.bf16.mxu0 %v884
    %1068 = vmatpush1.bf16.msra.mxu0 %v883
    %1069 = vmatprep.subr.bf16.mxu0 %v887
    %1070 = vmatpush1.bf16.msra.mxu0 %v886
    %1071 = vmatprep.subr.bf16.mxu0 %v890
    %1072 = vmatpush1.bf16.msra.mxu0 %v889
    %1073 = vmatprep.subr.bf16.mxu0 %v893
    %1074 = vmatpush1.bf16.msra.mxu0 %v892
    %1075 = vmatprep.subr.bf16.mxu0 %v896
    %1076 = vmatpush1.bf16.msra.mxu0 %v895
    %1077 = vmatprep.subr.bf16.mxu0 %v899
    %1078 = vmatpush1.bf16.msra.mxu0 %v898
    %1079 = vmatprep.subr.bf16.mxu0 %v902
    %1080 = vmatpush1.bf16.msra.mxu0 %v901
    %1081 = vmatprep.subr.bf16.mxu0 %v905
    %1082 = vmatpush1.bf16.msra.mxu0 %v904
    %1083 = vmatprep.mubr.bf16.mxu0 %v391
    %1084 = vmatmul.mubr.bf16.gmra.mrb[0].mxu0 %v390
    %v1085 = vpop.f32.mrb[0].mxu0
    %v1086 = vadd.f32 %v527, %v1085
    %v1087 = vpop.f32.mrb[0].mxu0
    %v1088 = vadd.f32 %v531, %v1087
    %v1089 = vpop.f32.mrb[0].mxu0
    %v1090 = vpop.f32.mrb[0].mxu0
    %1091 = vdwg.mxu0
    %1092 = vmatprep.subr.bf16.mxu0 %v908
    %1093 = vmatpush1.bf16.msra.mxu0 %v907
    %1094 = vmatprep.subr.bf16.mxu0 %v911
    %1095 = vmatpush1.bf16.msra.mxu0 %v910
    %1096 = vmatprep.subr.bf16.mxu0 %v914
    %1097 = vmatpush1.bf16.msra.mxu0 %v913
    %1098 = vmatprep.subr.bf16.mxu0 %v917
    %1099 = vmatpush1.bf16.msra.mxu0 %v916
    %1100 = vmatprep.subr.bf16.mxu0 %v920
    %1101 = vmatpush1.bf16.msra.mxu0 %v919
    %1102 = vmatprep.subr.bf16.mxu0 %v923
    %1103 = vmatpush1.bf16.msra.mxu0 %v922
    %1104 = vmatprep.subr.bf16.mxu0 %v926
    %1105 = vmatpush1.bf16.msra.mxu0 %v925
    %1106 = vmatprep.subr.bf16.mxu0 %v929
    %1107 = vmatpush1.bf16.msra.mxu0 %v928
    %1108 = vmatprep.subr.bf16.mxu0 %v932
    %1109 = vmatpush1.bf16.msra.mxu0 %v931
    %1110 = vmatprep.subr.bf16.mxu0 %v935
    %1111 = vmatpush1.bf16.msra.mxu0 %v934
    %1112 = vmatprep.subr.bf16.mxu0 %v938
    %1113 = vmatpush1.bf16.msra.mxu0 %v937
    %1114 = vmatprep.subr.bf16.mxu0 %v941
    %1115 = vmatpush1.bf16.msra.mxu0 %v940
    %1116 = vmatprep.subr.bf16.mxu0 %v944
    %1117 = vmatpush1.bf16.msra.mxu0 %v943
    %1118 = vmatprep.subr.bf16.mxu0 %v947
    %1119 = vmatpush1.bf16.msra.mxu0 %v946
    %1120 = vmatprep.subr.bf16.mxu0 %v950
    %1121 = vmatpush1.bf16.msra.mxu0 %v949
    %1122 = vmatprep.subr.bf16.mxu0 %v953
    %1123 = vmatpush1.bf16.msra.mxu0 %v952
    %1124 = vmatprep.mubr.bf16.mxu0 %v393
    %1125 = vmatmul.mubr.bf16.gmra.mrb[0].mxu0 %v392
    %v1126 = vpop.f32.mrb[0].mxu0
    %v1127 = vadd.f32 %v1086, %v1126
    %v1128 = vpop.f32.mrb[0].mxu0
    %v1129 = vadd.f32 %v1088, %v1128
    %v1130 = vpop.f32.mrb[0].mxu0
    %v1131 = vpop.f32.mrb[0].mxu0
    %1132 = vdwg.mxu0
    %1133 = vmatprep.subr.bf16.mxu0 0
    %1134 = vmatpush1.bf16.msra.mxu0 %v861
    %1135 = vmatprep.subr.bf16.mxu0 0
    %1136 = vmatpush1.bf16.msra.mxu0 %v864
    %1137 = vmatprep.subr.bf16.mxu0 0
    %1138 = vmatpush1.bf16.msra.mxu0 %v867
    %1139 = vmatprep.subr.bf16.mxu0 0
    %1140 = vmatpush1.bf16.msra.mxu0 %v870
    %1141 = vmatprep.subr.bf16.mxu0 0
    %1142 = vmatpush1.bf16.msra.mxu0 %v873
    %1143 = vmatprep.subr.bf16.mxu0 0
    %1144 = vmatpush1.bf16.msra.mxu0 %v876
    %1145 = vmatprep.subr.bf16.mxu0 0
    %1146 = vmatpush1.bf16.msra.mxu0 %v879
    %1147 = vmatprep.subr.bf16.mxu0 0
    %1148 = vmatpush1.bf16.msra.mxu0 %v882
    %1149 = vmatprep.subr.bf16.mxu0 0
    %1150 = vmatpush1.bf16.msra.mxu0 %v885
    %1151 = vmatprep.subr.bf16.mxu0 0
    %1152 = vmatpush1.bf16.msra.mxu0 %v888
    %1153 = vmatprep.subr.bf16.mxu0 0
    %1154 = vmatpush1.bf16.msra.mxu0 %v891
    %1155 = vmatprep.subr.bf16.mxu0 0
    %1156 = vmatpush1.bf16.msra.mxu0 %v894
    %1157 = vmatprep.subr.bf16.mxu0 0
    %1158 = vmatpush1.bf16.msra.mxu0 %v897
    %1159 = vmatprep.subr.bf16.mxu0 0
    %1160 = vmatpush1.bf16.msra.mxu0 %v900
    %1161 = vmatprep.subr.bf16.mxu0 0
    %1162 = vmatpush1.bf16.msra.mxu0 %v903
    %1163 = vmatprep.subr.bf16.mxu0 0
    %1164 = vmatpush1.bf16.msra.mxu0 %v906
    %1165 = vmatprep.mubr.bf16.mxu0 %v391
    %1166 = vmatmul.mubr.bf16.gmra.mrb[0].mxu0 %v390
    %v1167 = vpop.f32.mrb[0].mxu0
    %v1168 = vadd.f32 %v535, %v1167
    %v1169 = vpop.f32.mrb[0].mxu0
    %v1170 = vpop.f32.mrb[0].mxu0
    %v1171 = vpop.f32.mrb[0].mxu0
    %1172 = vdwg.mxu0
    %1173 = vmatprep.subr.bf16.mxu0 0
    %1174 = vmatpush1.bf16.msra.mxu0 %v909
    %1175 = vmatprep.subr.bf16.mxu0 0
    %1176 = vmatpush1.bf16.msra.mxu0 %v912
    %1177 = vmatprep.subr.bf16.mxu0 0
    %1178 = vmatpush1.bf16.msra.mxu0 %v915
    %1179 = vmatprep.subr.bf16.mxu0 0
    %1180 = vmatpush1.bf16.msra.mxu0 %v918
    %1181 = vmatprep.subr.bf16.mxu0 0
    %1182 = vmatpush1.bf16.msra.mxu0 %v921
    %1183 = vmatprep.subr.bf16.mxu0 0
    %1184 = vmatpush1.bf16.msra.mxu0 %v924
    %1185 = vmatprep.subr.bf16.mxu0 0
    %1186 = vmatpush1.bf16.msra.mxu0 %v927
    %1187 = vmatprep.subr.bf16.mxu0 0
    %1188 = vmatpush1.bf16.msra.mxu0 %v930
    %1189 = vmatprep.subr.bf16.mxu0 0
    %1190 = vmatpush1.bf16.msra.mxu0 %v933
    %1191 = vmatprep.subr.bf16.mxu0 0
    %1192 = vmatpush1.bf16.msra.mxu0 %v936
    %1193 = vmatprep.subr.bf16.mxu0 0
    %1194 = vmatpush1.bf16.msra.mxu0 %v939
    %1195 = vmatprep.subr.bf16.mxu0 0
    %1196 = vmatpush1.bf16.msra.mxu0 %v942
    %1197 = vmatprep.subr.bf16.mxu0 0
    %1198 = vmatpush1.bf16.msra.mxu0 %v945
    %1199 = vmatprep.subr.bf16.mxu0 0
    %1200 = vmatpush1.bf16.msra.mxu0 %v948
    %1201 = vmatprep.subr.bf16.mxu0 0
    %1202 = vmatpush1.bf16.msra.mxu0 %v951
    %1203 = vmatprep.subr.bf16.mxu0 0
    %1204 = vmatpush1.bf16.msra.mxu0 %v954
    %1205 = vmatprep.mubr.bf16.mxu0 %v393
    %1206 = vmatmul.mubr.bf16.gmra.mrb[0].mxu0 %v392
    %v1207 = vpop.f32.mrb[0].mxu0
    %v1208 = vadd.f32 %v1168, %v1207
    %v1209 = vpop.f32.mrb[0].mxu0
    %v1210 = vpop.f32.mrb[0].mxu0
    %v1211 = vpop.f32.mrb[0].mxu0
    %1212 = vdwg.mxu0
    %vm1213 = vcmp.ge.f32.partialorder %v1127, 0.0
    %vm1214 = vcmp.ge.f32.partialorder %v1129, 0.0
    %vm1215 = vcmp.ge.f32.partialorder %v1208, 0.0
    %v1216 = vmul.f32 %v1127, 0.01
    %v1217 = vmul.f32 %v1129, 0.01
    %v1218 = vmul.f32 %v1208, 0.01
    %v1219 = vsel %vm1213, %v1127, %v1216
    %v1220 = vsel %vm1214, %v1129, %v1217
    %v1221 = vsel %vm1215, %v1208, %v1218
    %v1222 = vpack.c.bf16 %v1219, %v1219
    %v1223 = vpack.c.bf16 %v1220, %v1220
    %v1224 = vpack.c.bf16 %v1221, %v1221
    %v1225 = vld [vmem:[#allocation8] sm:$0xf]
    %v1226 = vld [vmem:[#allocation8 + $0x4] sm:$0xf]
    %v1227 = vld [vmem:[#allocation8 + $0x8] sm:$0xf]
    %v1228 = vld [vmem:[#allocation8 + $0xc] sm:$0xf]
    %v1229 = vld [vmem:[#allocation8 + $0x10] sm:$0xf]
    %v1230 = vld [vmem:[#allocation8 + $0x14] sm:$0xf]
    %v1231 = vld [vmem:[#allocation8 + $0x18] sm:$0xf]
    %v1232 = vld [vmem:[#allocation8 + $0x1c] sm:$0xf]
    %v1233 = vld [vmem:[#allocation8 + $0x20] sm:$0xf]
    %v1234 = vld [vmem:[#allocation8 + $0x24] sm:$0xf]
    %v1235 = vld [vmem:[#allocation8 + $0x28] sm:$0xf]
    %v1236 = vld [vmem:[#allocation8 + $0x2c] sm:$0xf]
    %v1237 = vld [vmem:[#allocation8 + $0x30] sm:$0xf]
    %v1238 = vld [vmem:[#allocation8 + $0x34] sm:$0xf]
    %v1239 = vld [vmem:[#allocation8 + $0x38] sm:$0xf]
    %v1240 = vld [vmem:[#allocation8 + $0x3c] sm:$0xf]
    %v1241 = vld [vmem:[#allocation8 + $0x40] sm:$0xf]
    %v1242 = vld [vmem:[#allocation8 + $0x44] sm:$0xf]
    %v1243 = vld [vmem:[#allocation8 + $0x48] sm:$0xf]
    %v1244 = vld [vmem:[#allocation8 + $0x4c] sm:$0xf]
    %v1245 = vld [vmem:[#allocation8 + $0x50] sm:$0xf]
    %v1246 = vld [vmem:[#allocation8 + $0x54] sm:$0xf]
    %v1247 = vld [vmem:[#allocation8 + $0x58] sm:$0xf]
    %v1248 = vld [vmem:[#allocation8 + $0x5c] sm:$0xf]
    %v1249 = vld [vmem:[#allocation8 + $0x60] sm:$0xf]
    %v1250 = vld [vmem:[#allocation8 + $0x64] sm:$0xf]
    %v1251 = vld [vmem:[#allocation8 + $0x68] sm:$0xf]
    %v1252 = vld [vmem:[#allocation8 + $0x6c] sm:$0xf]
    %v1253 = vld [vmem:[#allocation8 + $0x70] sm:$0xf]
    %v1254 = vld [vmem:[#allocation8 + $0x74] sm:$0xf]
    %v1255 = vld [vmem:[#allocation8 + $0x78] sm:$0xf]
    %v1256 = vld [vmem:[#allocation8 + $0x7c] sm:$0xf]
    %v1257 = vld [vmem:[#allocation8 + $0x80] sm:$0xf]
    %v1258 = vld [vmem:[#allocation8 + $0x84] sm:$0xf]
    %v1259 = vld [vmem:[#allocation8 + $0x88] sm:$0xf]
    %v1260 = vld [vmem:[#allocation8 + $0x8c] sm:$0xf]
    %v1261 = vld [vmem:[#allocation8 + $0x90] sm:$0xf]
    %v1262 = vld [vmem:[#allocation8 + $0x94] sm:$0xf]
    %v1263 = vld [vmem:[#allocation8 + $0x98] sm:$0xf]
    %v1264 = vld [vmem:[#allocation8 + $0x9c] sm:$0xf]
    %v1265 = vld [vmem:[#allocation8 + $0xa0] sm:$0xf]
    %v1266 = vld [vmem:[#allocation8 + $0xa4] sm:$0xf]
    %v1267 = vld [vmem:[#allocation8 + $0xa8] sm:$0xf]
    %v1268 = vld [vmem:[#allocation8 + $0xac] sm:$0xf]
    %v1269 = vld [vmem:[#allocation8 + $0xb0] sm:$0xf]
    %v1270 = vld [vmem:[#allocation8 + $0xb4] sm:$0xf]
    %v1271 = vld [vmem:[#allocation8 + $0xb8] sm:$0xf]
    %v1272 = vld [vmem:[#allocation8 + $0xbc] sm:$0xf]
    %v1273 = vld [vmem:[%s6] sm:$0x1]
    %v1275 = vlaneseq
    %v1276 = vshrl.u32 %v1275, 7
    %v1277 = vsub.s32 0, %v1276
    %v1278 = vrot.slane %v1273, %v1277
    %v1328 = vunpack.c.l.b16 %v1225
    %v1329 = vunpack.c.l.b16 %v1226
    %v1330 = vunpack.c.l.b16 %v1227
    %v1331 = vunpack.c.l.b16 %v1228
    %v1332 = vunpack.c.l.b16 %v1229
    %v1333 = vunpack.c.l.b16 %v1230
    %v1334 = vunpack.c.l.b16 %v1231
    %v1335 = vunpack.c.l.b16 %v1232
    %v1336 = vunpack.c.l.b16 %v1233
    %v1337 = vunpack.c.l.b16 %v1234
    %v1338 = vunpack.c.l.b16 %v1235
    %v1339 = vunpack.c.l.b16 %v1236
    %v1340 = vunpack.c.l.b16 %v1237
    %v1341 = vunpack.c.l.b16 %v1238
    %v1342 = vunpack.c.l.b16 %v1239
    %v1343 = vunpack.c.l.b16 %v1240
    %v1344 = vunpack.c.l.b16 %v1241
    %v1345 = vunpack.c.l.b16 %v1242
    %v1346 = vunpack.c.l.b16 %v1243
    %v1347 = vunpack.c.l.b16 %v1244
    %v1348 = vunpack.c.l.b16 %v1245
    %v1349 = vunpack.c.l.b16 %v1246
    %v1350 = vunpack.c.l.b16 %v1247
    %v1351 = vunpack.c.l.b16 %v1248
    %v1352 = vunpack.c.l.b16 %v1249
    %v1353 = vunpack.c.l.b16 %v1250
    %v1354 = vunpack.c.l.b16 %v1251
    %v1355 = vunpack.c.l.b16 %v1252
    %v1356 = vunpack.c.l.b16 %v1253
    %v1357 = vunpack.c.l.b16 %v1254
    %v1358 = vunpack.c.l.b16 %v1255
    %v1359 = vunpack.c.l.b16 %v1256
    %v1360 = vunpack.c.l.b16 %v1257
    %v1361 = vunpack.c.l.b16 %v1258
    %v1362 = vunpack.c.l.b16 %v1259
    %v1363 = vunpack.c.l.b16 %v1260
    %v1364 = vunpack.c.l.b16 %v1261
    %v1365 = vunpack.c.l.b16 %v1262
    %v1366 = vunpack.c.l.b16 %v1263
    %v1367 = vunpack.c.l.b16 %v1264
    %v1368 = vunpack.c.l.b16 %v1265
    %v1369 = vunpack.c.l.b16 %v1266
    %v1370 = vunpack.c.l.b16 %v1267
    %v1371 = vunpack.c.l.b16 %v1268
    %v1372 = vunpack.c.l.b16 %v1269
    %v1373 = vunpack.c.l.b16 %v1270
    %v1374 = vunpack.c.l.b16 %v1271
    %v1375 = vunpack.c.l.b16 %v1272
    %v1376 = vpack.c.b16 %v1329, %v1328
    %v1377 = vpack.c.b16 %v1331, %v1330
    %v1378 = vpack.c.b16 %v1333, %v1332
    %v1379 = vpack.c.b16 %v1335, %v1334
    %v1380 = vpack.c.b16 %v1337, %v1336
    %v1381 = vpack.c.b16 %v1339, %v1338
    %v1382 = vpack.c.b16 %v1341, %v1340
    %v1383 = vpack.c.b16 %v1343, %v1342
    %v1384 = vpack.c.b16 %v1345, %v1344
    %v1385 = vpack.c.b16 %v1347, %v1346
    %v1386 = vpack.c.b16 %v1349, %v1348
    %v1387 = vpack.c.b16 %v1351, %v1350
    %v1388 = vpack.c.b16 %v1353, %v1352
    %v1389 = vpack.c.b16 %v1355, %v1354
    %v1390 = vpack.c.b16 %v1357, %v1356
    %v1391 = vpack.c.b16 %v1359, %v1358
    %v1392 = vpack.c.b16 %v1361, %v1360
    %v1393 = vpack.c.b16 %v1363, %v1362
    %v1394 = vpack.c.b16 %v1365, %v1364
    %v1395 = vpack.c.b16 %v1367, %v1366
    %v1396 = vpack.c.b16 %v1369, %v1368
    %v1397 = vpack.c.b16 %v1371, %v1370
    %v1398 = vpack.c.b16 %v1373, %v1372
    %v1399 = vpack.c.b16 %v1375, %v1374
    %1424 = vmatprep.subr.bf16.mxu0 0
    %1425 = vmatpush1.bf16.msra.mxu0 %v1376
    %1426 = vmatprep.subr.bf16.mxu0 0
    %1427 = vmatpush1.bf16.msra.mxu0 %v1377
    %1428 = vmatprep.subr.bf16.mxu0 0
    %1429 = vmatpush1.bf16.msra.mxu0 %v1378
    %1430 = vmatprep.subr.bf16.mxu0 0
    %1431 = vmatpush1.bf16.msra.mxu0 %v1379
    %1432 = vmatprep.subr.bf16.mxu0 0
    %1433 = vmatpush1.bf16.msra.mxu0 %v1380
    %1434 = vmatprep.subr.bf16.mxu0 0
    %1435 = vmatpush1.bf16.msra.mxu0 %v1381
    %1436 = vmatprep.subr.bf16.mxu0 0
    %1437 = vmatpush1.bf16.msra.mxu0 %v1382
    %1438 = vmatprep.subr.bf16.mxu0 0
    %1439 = vmatpush1.bf16.msra.mxu0 %v1383
    %1440 = vmatprep.subr.bf16.mxu0 0
    %1441 = vmatpush1.bf16.msra.mxu0 %v1384
    %1442 = vmatprep.subr.bf16.mxu0 0
    %1443 = vmatpush1.bf16.msra.mxu0 %v1385
    %1444 = vmatprep.subr.bf16.mxu0 0
    %1445 = vmatpush1.bf16.msra.mxu0 %v1386
    %1446 = vmatprep.subr.bf16.mxu0 0
    %1447 = vmatpush1.bf16.msra.mxu0 %v1387
    %1448 = vmatprep.subr.bf16.mxu0 0
    %1449 = vmatpush1.bf16.msra.mxu0 %v1388
    %1450 = vmatprep.subr.bf16.mxu0 0
    %1451 = vmatpush1.bf16.msra.mxu0 %v1389
    %1452 = vmatprep.subr.bf16.mxu0 0
    %1453 = vmatpush1.bf16.msra.mxu0 %v1390
    %1454 = vmatprep.subr.bf16.mxu0 0
    %1455 = vmatpush1.bf16.msra.mxu0 %v1391
    %1456 = vmatprep.mubr.bf16.mxu0 %v1223
    %1457 = vmatmul.mubr.bf16.gmra.mrb[0].mxu0 %v1222
    %v1458 = vpop.f32.mrb[0].mxu0
    %v1459 = vadd.f32 %v1278, %v1458
    %v1460 = vpop.f32.mrb[0].mxu0
    %v1461 = vpop.f32.mrb[0].mxu0
    %v1462 = vpop.f32.mrb[0].mxu0
    %1463 = vdwg.mxu0
    %1464 = vmatprep.subr.bf16.mxu0 0
    %1465 = vmatpush1.bf16.msra.mxu0 %v1392
    %1466 = vmatprep.subr.bf16.mxu0 0
    %1467 = vmatpush1.bf16.msra.mxu0 %v1393
    %1468 = vmatprep.subr.bf16.mxu0 0
    %1469 = vmatpush1.bf16.msra.mxu0 %v1394
    %1470 = vmatprep.subr.bf16.mxu0 0
    %1471 = vmatpush1.bf16.msra.mxu0 %v1395
    %1472 = vmatprep.subr.bf16.mxu0 0
    %1473 = vmatpush1.bf16.msra.mxu0 %v1396
    %1474 = vmatprep.subr.bf16.mxu0 0
    %1475 = vmatpush1.bf16.msra.mxu0 %v1397
    %1476 = vmatprep.subr.bf16.mxu0 0
    %1477 = vmatpush1.bf16.msra.mxu0 %v1398
    %1478 = vmatprep.subr.bf16.mxu0 0
    %1479 = vmatpush1.bf16.msra.mxu0 %v1399
    %1480 = vmatprep.subr.bf16.mxu0 0
    %1481 = vmatpush1.bf16.msra.mxu0 0
    %1482 = vmatprep.subr.bf16.mxu0 0
    %1483 = vmatpush1.bf16.msra.mxu0 0
    %1484 = vmatprep.subr.bf16.mxu0 0
    %1485 = vmatpush1.bf16.msra.mxu0 0
    %1486 = vmatprep.subr.bf16.mxu0 0
    %1487 = vmatpush1.bf16.msra.mxu0 0
    %1488 = vmatprep.subr.bf16.mxu0 0
    %1489 = vmatpush1.bf16.msra.mxu0 0
    %1490 = vmatprep.subr.bf16.mxu0 0
    %1491 = vmatpush1.bf16.msra.mxu0 0
    %1492 = vmatprep.subr.bf16.mxu0 0
    %1493 = vmatpush1.bf16.msra.mxu0 0
    %1494 = vmatprep.subr.bf16.mxu0 0
    %1495 = vmatpush1.bf16.msra.mxu0 0
    %1496 = vmatprep.mubr.bf16.mxu0 0
    %1497 = vmatmul.mubr.bf16.gmra.mrb[0].mxu0 %v1224
    %v1498 = vpop.f32.mrb[0].mxu0
    %v1499 = vadd.f32 %v1459, %v1498
    %v1500 = vpop.f32.mrb[0].mxu0
    %v1501 = vpop.f32.mrb[0].mxu0
    %v1502 = vpop.f32.mrb[0].mxu0
    %1503 = vdwg.mxu0
    %v1504 = vsub.f32 500.0, %v1499
    %v1505 = vmax.f32 %v1504, 0.0
    %v1506 = vand.u32 2147483647, %v1504
    %v1507 = vsub.f32 0.0, %v1506
    %v1508 = vmul.f32 %v1507, 1.442695
    %v1509 = vpow.pop %v1508
    %v1510 = vadd.f32 %v1509, 1.0
    %v1511 = vlog2.pop %v1510
    %v1512 = vmul.f32 %v1511, 0.6931472
    %v1513 = vadd.f32 %v1505, %v1512
    %v1514 = vsub.f32 500.0, %v1513
    %v1515 = vsub.f32 %v1514, 1e-08
    %v1516 = vmax.f32 %v1515, 0.0
    %v1517 = vand.u32 2147483647, %v1515
    %v1518 = vsub.f32 0.0, %v1517
    %v1519 = vmul.f32 %v1518, 1.442695
    %v1520 = vpow.pop %v1519
    %v1521 = vadd.f32 %v1520, 1.0
    %v1522 = vlog2.pop %v1521
    %v1523 = vmul.f32 %v1522, 0.6931472
    %v1524 = vadd.f32 %v1516, %v1523
    %v1525 = vadd.f32 %v1524, 1e-08
    %1526 = vst [vmem:[#allocation10] sm:$0xff] %v1525
    // Predicated region
    $region46: #{tpu_custom_call.1} parent=1 // pred_check
      _
    $region47: #{tpu_custom_call.1} parent=1 // pred_check_branch
      %1528 = sbr.rel (0) target = $region49
    $region48: #{tpu_custom_call.1} parent=1 // pred_region
      %s1530 = ssub.s32 128, 128
      %1531 = vsyncadd [#allocation4], %s1530
      %s1533 = sshll.u32 [#allocation10], 4
      %s1534 = int_to_ptr.vmem [resolvable:$true] %s1533
      %1536 = dma.vmem_to_hbm [thread:$0]  %s1534, 128, %s7, [#allocation4]
    $region49: #{tpu_custom_call.1} parent=1 // pred_fallthru
      _
    // Predicated region
    $region50: #{tpu_custom_call.1} parent=1 // pred_check
      _
    $region51: #{tpu_custom_call.1} parent=1 // pred_check_branch
      %1538 = sbr.rel (0) target = $region53
    $region52: #{tpu_custom_call.1} parent=1 // pred_region
      %1539 = dma.done [#allocation4], 128
    $region53: #{tpu_custom_call.1} parent=1 // pred_fallthru
      _
    %1540 = vsyncpa [#allocation3], 1
    %1541 = vsyncpa [#allocation6], 1
    %1542 = vsyncpa [#allocation9], 1
    %1543 = vsyncpa [#allocation4], 1

</llo_original>
